<compile_context>
chip_gen: v6e
topology: v6e:2x2x1
jax: 0.10.0
libtpu: 0.0.40
codegen_flags: <defaults>
</compile_context>

<pallas_src>
import jax
import jax.numpy as jnp
from jax.experimental import pallas as pl
from jax.experimental.pallas import tpu as pltpu


def _round_up(n, m):
    return pl.cdiv(n, m) * m


def _vqa_header_kernel(x_ref, w1_ref, b1_ref, w2_ref, b2_ref, o_ref, h_ref):
    # Grid = (batch tiles, vocab tiles); vocab axis is innermost ("arbitrary").
    j = pl.program_id(1)

    # First Linear + Tanh: compute once per batch tile (j == 0) and keep the
    # f32 activations resident in VMEM scratch for all vocab tiles.
    @pl.when(j == 0)
    def _():
        x = x_ref[...].astype(jnp.bfloat16)                              # (bb, D)
        h = jnp.dot(x, w1_ref[...],
                    preferred_element_type=jnp.float32) + b1_ref[...]    # (bb, Hp) f32
        h_ref[...] = jnp.tanh(h)                                         # f32 EUP

    # Second Linear + Sigmoid over this vocab tile.
    logits = jnp.dot(h_ref[...].astype(jnp.bfloat16), w2_ref[...],
                     preferred_element_type=jnp.float32) + b2_ref[...]   # (bb, tv) f32
    o_ref[...] = jax.nn.sigmoid(logits).astype(o_ref.dtype)


def vqa_header_forward(hidden_states, w1, b1, w2, b2, *,
                       block_b=256, block_v=1024, out_dtype=jnp.float32):
    """Fused MLP head: sigmoid(Linear(tanh(Linear(x)))).

    hidden_states: (B, D) float32 (or bf16)
    w1: (D, H) , b1: (H,)
    w2: (H, V) , b2: (V,)
    returns: (B, V) out_dtype
    """
    B, D = hidden_states.shape
    H = w1.shape[1]
    V = w2.shape[1]

    # --- Hidden padding: H to a multiple of 128 (lane-dense vregs, clean MXU tiles).
    Hp = _round_up(H, 128)

    # --- Vocab tiling: nv tiles of width tv (multiple of 128), balanced so the
    #     total padded width Vpp stays close to V.
    Vp = _round_up(V, 128)
    nv = max(1, pl.cdiv(Vp, block_v))
    tv = _round_up(pl.cdiv(Vp, nv), 128)
    Vpp = tv * nv

    # --- Batch tiling: balance tile size against B (minimize trailing padding)
    #     and prefer >= 2 grid steps so v7x's two TensorCores both get work.
    nb = max(1, pl.cdiv(B, block_b))
    if nb == 1 and B >= 16:
        nb = 2
    bb = _round_up(pl.cdiv(B, nb), 8)
    Bp = _round_up(B, bb)
    nb = Bp // bb

    # --- Parameter preparation: bf16 weights (MXU-native), f32 biases.
    w1p = jnp.pad(w1, ((0, 0), (0, Hp - H))).astype(jnp.bfloat16)          # (D, Hp)
    b1p = jnp.pad(b1, (0, Hp - H)).reshape(1, Hp).astype(jnp.float32)      # (1, Hp)
    w2p = jnp.pad(w2, ((0, Hp - H), (0, Vpp - V))).astype(jnp.bfloat16)    # (Hp, Vpp)
    b2p = jnp.pad(b2, (0, Vpp - V)).reshape(1, Vpp).astype(jnp.float32)    # (1, Vpp)

    xp = hidden_states
    if Bp != B:
        xp = jnp.pad(hidden_states, ((0, Bp - B), (0, 0)))

    x_bytes = xp.dtype.itemsize
    o_bytes = jnp.dtype(out_dtype).itemsize

    # --- Explicit VMEM budget from the actual padded shapes (+ headroom).
    w2_buf = 1 if nv == 1 else 2
    vmem_bytes = (
        2 * bb * D * x_bytes            # x tile (double-buffered)
        + 1 * D * Hp * 2                # w1 bf16 (single-buffered, resident)
        + 1 * 8 * Hp * 4                # b1 f32 (sublane-padded)
        + w2_buf * Hp * tv * 2          # w2 tile(s) bf16
        + w2_buf * 8 * tv * 4           # b2 tile(s) f32
        + 2 * bb * tv * o_bytes         # out tile (double-buffered)
        + bb * Hp * 4                   # h scratch (f32)
    )
    vmem_limit = min(max(int(vmem_bytes * 1.5) + (4 << 20), 32 << 20), 64 << 20)

    cost = pl.CostEstimate(
        flops=2 * Bp * D * Hp + 2 * Bp * Hp * Vpp,
        transcendentals=Bp * (Hp + Vpp),
        bytes_accessed=(Bp * D * x_bytes + D * Hp * 2 + Hp * 4
                        + Hp * Vpp * 2 + Vpp * 4 + Bp * Vpp * o_bytes),
    )

    w2_mode = pl.Buffered(1) if nv == 1 else pl.Buffered(2)

    out = pl.pallas_call(
        _vqa_header_kernel,
        out_shape=jax.ShapeDtypeStruct((Bp, Vpp), out_dtype),
        grid=(nb, nv),
        in_specs=[
            # x: batch-tiled; block index constant over j -> no re-fetch per vocab tile.
            pl.BlockSpec((bb, D), lambda i, j: (i, 0)),
            # w1 / b1: resident across the whole grid -> single-buffered.
            pl.BlockSpec((D, Hp), lambda i, j: (0, 0), pipeline_mode=pl.Buffered(1)),
            pl.BlockSpec((1, Hp), lambda i, j: (0, 0), pipeline_mode=pl.Buffered(1)),
            # w2 / b2: vocab-tiled (single-buffered when there is only one tile).
            pl.BlockSpec((Hp, tv), lambda i, j: (0, j), pipeline_mode=w2_mode),
            pl.BlockSpec((1, tv), lambda i, j: (0, j), pipeline_mode=w2_mode),
        ],
        out_specs=pl.BlockSpec((bb, tv), lambda i, j: (i, j)),
        scratch_shapes=[pltpu.VMEM((bb, Hp), jnp.float32)],   # tanh activations
        compiler_params=pltpu.CompilerParams(
            dimension_semantics=("parallel", "arbitrary"),     # batch split on v7x
            vmem_limit_bytes=vmem_limit,
        ),
        cost_estimate=cost,
    )(xp, w1p, b1p, w2p, b2p)

    # Strip batch / vocab padding outside the kernel.
    return out[:B, :V]


def vqa_header_reference(hidden_states, w1, b1, w2, b2):
    h = jnp.tanh(hidden_states @ w1 + b1)
    return jax.nn.sigmoid(h @ w2 + b2)


if __name__ == "__main__":
    # Small shapes consistent with the module:
    #   args.model_config['image_feature_output'] = D
    #   hidden layer = 1000 (hard-coded in the module)
    #   ans_vocab_size = V
    B = 8          # batch
    D = 128        # image_feature_output
    H = 1000       # MLP hidden (fixed by module)
    V = 16         # ans_vocab_size

    key = jax.random.PRNGKey(0)
    k_x, k_w1, k_b1, k_w2, k_b2 = jax.random.split(key, 5)

    hidden_states = jax.random.normal(k_x, (B, D), dtype=jnp.float32)
    # Deterministic parameter init (synthetic weights, no checkpoint load).
    w1 = jax.random.normal(k_w1, (D, H), dtype=jnp.float32) * 0.02
    b1 = jax.random.normal(k_b1, (H,), dtype=jnp.float32) * 0.02
    w2 = jax.random.normal(k_w2, (H, V), dtype=jnp.float32) * 0.02
    b2 = jax.random.normal(k_b2, (V,), dtype=jnp.float32) * 0.02

    out = vqa_header_forward(hidden_states, w1, b1, w2, b2)
    out = jax.block_until_ready(out)

    ref = vqa_header_reference(hidden_states, w1, b1, w2, b2)
    assert out.shape == (B, V), out.shape
    # bf16 weights + bf16 matmul inputs (f32 accumulate) -> loosened tolerance.
    assert jnp.allclose(out, ref, atol=5e-3, rtol=5e-3), "mismatch vs reference"

    print("KERNEL_OK")
</pallas_src>

<mosaic_0001>
module attributes {stable_mosaic.version = 11 : i64} {
  func.func @_vqa_header_kernel(%arg0: i32, %arg1: i32, %arg2: memref<8x128xf32, #tpu.memory_space<vmem>>, %arg3: memref<128x1024xbf16, #tpu.memory_space<vmem>>, %arg4: memref<1x1024xf32, #tpu.memory_space<vmem>>, %arg5: memref<1024x128xbf16, #tpu.memory_space<vmem>>, %arg6: memref<1x128xf32, #tpu.memory_space<vmem>>, %arg7: memref<8x128xf32, #tpu.memory_space<vmem>>, %arg8: memref<8x1024xf32, #tpu.memory_space<vmem>>) attributes {dimension_semantics = [#tpu.dimension_semantics<parallel>, #tpu.dimension_semantics<arbitrary>], iteration_bounds = array<i64: 1, 1>, scalar_prefetch = 0 : i64, scratch_operands = 1 : i64, tpu.core_type = #tpu.core_type<tc>, window_params = [{transform_indices = @transform_0, window_bounds = array<i64: 8, 128>}, {pipeline_mode = #tpu.pipeline_mode<synchronous>, transform_indices = @transform_1, window_bounds = array<i64: 128, 1024>}, {pipeline_mode = #tpu.pipeline_mode<synchronous>, transform_indices = @transform_2, window_bounds = array<i64: 1, 1024>}, {pipeline_mode = #tpu.pipeline_mode<synchronous>, transform_indices = @transform_3, window_bounds = array<i64: 1024, 128>}, {pipeline_mode = #tpu.pipeline_mode<synchronous>, transform_indices = @transform_4, window_bounds = array<i64: 1, 128>}, {transform_indices = @transform_5, window_bounds = array<i64: 8, 128>}]} {
    %c0_i32 = arith.constant 0 : i32
    %0 = arith.cmpi eq, %arg1, %c0_i32 : i32
    %1 = arith.extui %0 : i1 to i32
    %c0_i32_0 = arith.constant 0 : i32
    %2 = arith.cmpi ne, %1, %c0_i32_0 : i32
    scf.if %2 {
      %c0_9 = arith.constant 0 : index
      %c0_10 = arith.constant 0 : index
      %16 = vector.load %arg2[%c0_9, %c0_10] : memref<8x128xf32, #tpu.memory_space<vmem>>, vector<8x128xf32>
      %17 = arith.truncf %16 : vector<8x128xf32> to vector<8x128xbf16>
      %c0_11 = arith.constant 0 : index
      %c0_12 = arith.constant 0 : index
      %18 = vector.load %arg3[%c0_11, %c0_12] : memref<128x1024xbf16, #tpu.memory_space<vmem>>, vector<128x1024xbf16>
      %cst_13 = arith.constant dense<0.000000e+00> : vector<8x1024xf32>
      %19 = tpu.matmul %17, %18, %cst_13 {dimension_numbers = #tpu.dot_dimension_numbers<[1], [0], [0], [1], [0, 0, 1, 1], [], []>} : vector<8x128xbf16>, vector<128x1024xbf16>, vector<8x1024xf32> -> vector<8x1024xf32>
      %c0_14 = arith.constant 0 : index
      %c0_15 = arith.constant 0 : index
      %20 = vector.load %arg4[%c0_14, %c0_15] : memref<1x1024xf32, #tpu.memory_space<vmem>>, vector<1x1024xf32>
      %21 = vector.broadcast %20 : vector<1x1024xf32> to vector<8x1024xf32>
      %22 = arith.addf %19, %21 : vector<8x1024xf32>
      %23 = math.tanh %22 : vector<8x1024xf32>
      %c0_16 = arith.constant 0 : index
      %c0_17 = arith.constant 0 : index
      %24 = vector.load %arg8[%c0_16, %c0_17] : memref<8x1024xf32, #tpu.memory_space<vmem>>, vector<8x1024xf32>
      tpu.vector_store %arg8[%c0_16, %c0_17], %23 {strides = array<i32>} : memref<8x1024xf32, #tpu.memory_space<vmem>>, vector<8x1024xf32>,
    } else {
    }
    %c0 = arith.constant 0 : index
    %c0_1 = arith.constant 0 : index
    %3 = vector.load %arg8[%c0, %c0_1] : memref<8x1024xf32, #tpu.memory_space<vmem>>, vector<8x1024xf32>
    %4 = arith.truncf %3 : vector<8x1024xf32> to vector<8x1024xbf16>
    %c0_2 = arith.constant 0 : index
    %c0_3 = arith.constant 0 : index
    %5 = vector.load %arg5[%c0_2, %c0_3] : memref<1024x128xbf16, #tpu.memory_space<vmem>>, vector<1024x128xbf16>
    %cst = arith.constant dense<0.000000e+00> : vector<8x128xf32>
    %6 = tpu.matmul %4, %5, %cst {dimension_numbers = #tpu.dot_dimension_numbers<[1], [0], [0], [1], [0, 0, 1, 1], [], []>} : vector<8x1024xbf16>, vector<1024x128xbf16>, vector<8x128xf32> -> vector<8x128xf32>
    %c0_4 = arith.constant 0 : index
    %c0_5 = arith.constant 0 : index
    %7 = vector.load %arg6[%c0_4, %c0_5] : memref<1x128xf32, #tpu.memory_space<vmem>>, vector<1x128xf32>
    %8 = vector.broadcast %7 : vector<1x128xf32> to vector<8x128xf32>
    %9 = arith.addf %6, %8 : vector<8x128xf32>
    %10 = arith.negf %9 : vector<8x128xf32>
    %11 = math.exp %10 : vector<8x128xf32>
    %cst_6 = arith.constant 1.000000e+00 : f32
    %12 = vector.broadcast %cst_6 : f32 to vector<8x128xf32>
    %13 = arith.addf %12, %11 : vector<8x128xf32>
    %14 = arith.divf %12, %13 : vector<8x128xf32>
    %c0_7 = arith.constant 0 : index
    %c0_8 = arith.constant 0 : index
    %15 = vector.load %arg7[%c0_7, %c0_8] : memref<8x128xf32, #tpu.memory_space<vmem>>, vector<8x128xf32>
    tpu.vector_store %arg7[%c0_7, %c0_8], %14 {strides = array<i32>} : memref<8x128xf32, #tpu.memory_space<vmem>>, vector<8x128xf32>,
    return
  }
  func.func @transform_0(%arg0: i32, %arg1: i32) -> (i32, i32) {
    %c0_i32 = arith.constant 0 : i32
    %c0_i32_0 = arith.constant 0 : i32
    return %arg0, %c0_i32 : i32, i32
  }
  func.func @transform_1(%arg0: i32, %arg1: i32) -> (i32, i32) {
    %c0_i32 = arith.constant 0 : i32
    %c0_i32_0 = arith.constant 0 : i32
    %c0_i32_1 = arith.constant 0 : i32
    return %c0_i32, %c0_i32_0 : i32, i32
  }
  func.func @transform_2(%arg0: i32, %arg1: i32) -> (i32, i32) {
    %c0_i32 = arith.constant 0 : i32
    %c0_i32_0 = arith.constant 0 : i32
    %c0_i32_1 = arith.constant 0 : i32
    return %c0_i32, %c0_i32_0 : i32, i32
  }
  func.func @transform_3(%arg0: i32, %arg1: i32) -> (i32, i32) {
    %c0_i32 = arith.constant 0 : i32
    %c0_i32_0 = arith.constant 0 : i32
    return %c0_i32, %arg1 : i32, i32
  }
  func.func @transform_4(%arg0: i32, %arg1: i32) -> (i32, i32) {
    %c0_i32 = arith.constant 0 : i32
    %c0_i32_0 = arith.constant 0 : i32
    return %c0_i32, %arg1 : i32, i32
  }
  func.func @transform_5(%arg0: i32, %arg1: i32) -> (i32, i32) {
    %c0_i32 = arith.constant 0 : i32
    return %arg0, %arg1 : i32, i32
  }
}

</mosaic_0001>

<llo_original>
// kernel: tpu_custom_call.1
$region0: #{tpu_custom_call.1}
  #allocation0 [shape = 'u32[]', space=smem, size = 0x4, offset = 0x4, fixed_abs, tag = 'smem constant byte address 0x4 - core index']
  #allocation1 [shape = 'u32[144,128]{1,0:T(1,128)}', space=vmem, size = 0x12000, scoped, tag = 'internal scratch']
  #allocation2 [shape = 'f32[8,1024]{1,0:T(8,128)}', space=vmem, size = 0x8000, scoped, tag = 'scratch operand']
  %s0 = inlined_call_operand.hbm [shape: f32[8,128], index: 0, kind: input, shape index: {}]
  %s1 = inlined_call_operand.hbm [shape: bf16[128,1024], index: 1, kind: input, shape index: {}]
  %s2 = inlined_call_operand.hbm [shape: f32[1,1024], index: 2, kind: input, shape index: {}]
  %s3 = inlined_call_operand.hbm [shape: bf16[1024,128], index: 3, kind: input, shape index: {}]
  %s4 = inlined_call_operand.vmem [shape: f32[1,128], index: 4, kind: input, shape index: {}]
  %s5 = inlined_call_operand.hbm [shape: f32[8,128], index: 5, kind: output, shape index: {}]
  %s6 = sld [smem:[#allocation0]]
  $region50: #{tpu_custom_call.1} parent=0
    _
  %s8 = ssub.s32 1, %s6
  %s9 = scalar_select 0, %s8, %s6
  $region1: #{tpu_custom_call.1} parent=0
    #allocation3 [shape = 'u8[4096]{0}', space=vmem, size = 0x1000, scoped, tag = 'input window, operand 0, single buffered']
    #allocation4 [shape = 's32[1]{0}', space=sflag, size = 0x4, scoped, tag = 'scoped memory for tpu_custom_call.1']
    #allocation5 [shape = 's32[1]{0}', space=sflag, size = 0x4, scoped, tag = 'scoped memory for tpu_custom_call.1']
    #allocation6 [shape = 'u8[262144]{0}', space=vmem, size = 0x40000, scoped, tag = 'input window, operand 1, single buffered']
    #allocation7 [shape = 's32[1]{0}', space=sflag, size = 0x4, scoped, tag = 'scoped memory for tpu_custom_call.1']
    #allocation8 [shape = 'u8[4096]{0}', space=vmem, size = 0x1000, scoped, tag = 'input window, operand 2, single buffered']
    #allocation9 [shape = 'u8[262144]{0}', space=vmem, size = 0x40000, scoped, tag = 'input window, operand 3, single buffered']
    #allocation10 [shape = 's32[1]{0}', space=sflag, size = 0x4, scoped, tag = 'scoped memory for tpu_custom_call.1']
    #allocation11 [shape = 'u8[4096]{0}', space=vmem, size = 0x1000, scoped, tag = 'output window, operand 0, single buffered']
    %10 = vsyncpa [#allocation4], 0
    %11 = vsyncpa [#allocation7], 0
    %12 = vsyncpa [#allocation10], 0
    %13 = vsyncpa [#allocation5], 0
    // Predicated region
    $region2: #{tpu_custom_call.1} parent=1 // pred_check
      _
    $region3: #{tpu_custom_call.1} parent=1 // pred_check_branch
      %15 = sbr.rel (0) target = $region5
    $region4: #{tpu_custom_call.1} parent=1 // pred_region
      %s17 = ssub.s32 128, 128
      %18 = vsyncadd [#allocation4], %s17
      %s20 = sshll.u32 [#allocation3], 4
      %s21 = int_to_ptr.vmem [resolvable:$true] %s20
      %23 = dma.hbm_to_vmem [thread:$0]  %s0, 128, %s21, [#allocation4]
    $region5: #{tpu_custom_call.1} parent=1 // pred_fallthru
      _
    // Predicated region
    $region6: #{tpu_custom_call.1} parent=1 // pred_check
      _
    $region7: #{tpu_custom_call.1} parent=1 // pred_check_branch
      %25 = sbr.rel (0) target = $region9
    $region8: #{tpu_custom_call.1} parent=1 // pred_region
      %s27 = ssub.s32 8192, 8192
      %28 = vsyncadd [#allocation7], %s27
      %s29 = sshll.u32 [#allocation6], 4
      %s30 = int_to_ptr.vmem [resolvable:$true] %s29
      %35 = dma.hbm_to_vmem [thread:$0]  %s1, 8192, %s30, [#allocation7], 512, 512, 32
    $region9: #{tpu_custom_call.1} parent=1 // pred_fallthru
      _
    // Predicated region
    $region10: #{tpu_custom_call.1} parent=1 // pred_check
      _
    $region11: #{tpu_custom_call.1} parent=1 // pred_check_branch
      %37 = sbr.rel (0) target = $region13
    $region12: #{tpu_custom_call.1} parent=1 // pred_region
      %s39 = ssub.s32 128, 128
      %40 = vsyncadd [#allocation7], %s39
      %s42 = sshll.u32 [#allocation8], 4
      %s43 = int_to_ptr.vmem [resolvable:$true] %s42
      %45 = dma.hbm_to_vmem [thread:$0]  %s2, 128, %s43, [#allocation7]
    $region13: #{tpu_custom_call.1} parent=1 // pred_fallthru
      _
    // Predicated region
    $region14: #{tpu_custom_call.1} parent=1 // pred_check
      _
    $region15: #{tpu_custom_call.1} parent=1 // pred_check_branch
      %47 = sbr.rel (0) target = $region17
    $region16: #{tpu_custom_call.1} parent=1 // pred_region
      %s49 = ssub.s32 8192, 8192
      %50 = vsyncadd [#allocation10], %s49
      %s51 = sshll.u32 [#allocation9], 4
      %s52 = int_to_ptr.vmem [resolvable:$true] %s51
      %57 = dma.hbm_to_vmem [thread:$0]  %s3, 8192, %s52, [#allocation10], 64, 64, 4
    $region17: #{tpu_custom_call.1} parent=1 // pred_fallthru
      _
    // Predicated region
    $region18: #{tpu_custom_call.1} parent=1 // pred_check
      _
    $region19: #{tpu_custom_call.1} parent=1 // pred_check_branch
      %59 = sbr.rel (0) target = $region21
    $region20: #{tpu_custom_call.1} parent=1 // pred_region
      _
    $region21: #{tpu_custom_call.1} parent=1 // pred_fallthru
      _
    // Predicated region
    $region22: #{tpu_custom_call.1} parent=1 // pred_check
      _
    $region23: #{tpu_custom_call.1} parent=1 // pred_check_branch
      %61 = sbr.rel (0) target = $region25
    $region24: #{tpu_custom_call.1} parent=1 // pred_region
      %62 = dma.done [#allocation4], 128
    $region25: #{tpu_custom_call.1} parent=1 // pred_fallthru
      _
    // Predicated region
    $region26: #{tpu_custom_call.1} parent=1 // pred_check
      _
    $region27: #{tpu_custom_call.1} parent=1 // pred_check_branch
      %64 = sbr.rel (0) target = $region29
    $region28: #{tpu_custom_call.1} parent=1 // pred_region
      %65 = dma.done [#allocation7], 8192
    $region29: #{tpu_custom_call.1} parent=1 // pred_fallthru
      _
    // Predicated region
    $region30: #{tpu_custom_call.1} parent=1 // pred_check
      _
    $region31: #{tpu_custom_call.1} parent=1 // pred_check_branch
      %67 = sbr.rel (0) target = $region33
    $region32: #{tpu_custom_call.1} parent=1 // pred_region
      %68 = dma.done [#allocation7], 128
    $region33: #{tpu_custom_call.1} parent=1 // pred_fallthru
      _
    // Predicated region
    $region34: #{tpu_custom_call.1} parent=1 // pred_check
      _
    $region35: #{tpu_custom_call.1} parent=1 // pred_check_branch
      %70 = sbr.rel (0) target = $region37
    $region36: #{tpu_custom_call.1} parent=1 // pred_region
      %71 = dma.done [#allocation10], 8192
    $region37: #{tpu_custom_call.1} parent=1 // pred_fallthru
      _
    %p73 = scmp.eq.s32.totalorder 0, 0
    // Predicated region
    $region38: #{tpu_custom_call.1} parent=1 // pred_check
      %p74 = pneg %p73
    $region39: #{tpu_custom_call.1} parent=1 // pred_check_branch
      %76 = sbr.rel (%p74) target = $region41
    $region40: #{tpu_custom_call.1} parent=1 // pred_region
      %v77 = vld [vmem:[#allocation3] sm:$0xff]
      %v78 = vpack.c.bf16 %v77, %v77
      %v79 = vld [vmem:[#allocation6] sm:$0xff]
      %v80 = vld [vmem:[#allocation6 + $0x8] sm:$0xff]
      %v81 = vld [vmem:[#allocation6 + $0x10] sm:$0xff]
      %v82 = vld [vmem:[#allocation6 + $0x18] sm:$0xff]
      %v83 = vld [vmem:[#allocation6 + $0x20] sm:$0xff]
      %v84 = vld [vmem:[#allocation6 + $0x28] sm:$0xff]
      %v85 = vld [vmem:[#allocation6 + $0x30] sm:$0xff]
      %v86 = vld [vmem:[#allocation6 + $0x38] sm:$0xff]
      %v87 = vld [vmem:[#allocation6 + $0x40] sm:$0xff]
      %v88 = vld [vmem:[#allocation6 + $0x48] sm:$0xff]
      %v89 = vld [vmem:[#allocation6 + $0x50] sm:$0xff]
      %v90 = vld [vmem:[#allocation6 + $0x58] sm:$0xff]
      %v91 = vld [vmem:[#allocation6 + $0x60] sm:$0xff]
      %v92 = vld [vmem:[#allocation6 + $0x68] sm:$0xff]
      %v93 = vld [vmem:[#allocation6 + $0x70] sm:$0xff]
      %v94 = vld [vmem:[#allocation6 + $0x78] sm:$0xff]
      %v95 = vld [vmem:[#allocation6 + $0x80] sm:$0xff]
      %v96 = vld [vmem:[#allocation6 + $0x88] sm:$0xff]
      %v97 = vld [vmem:[#allocation6 + $0x90] sm:$0xff]
      %v98 = vld [vmem:[#allocation6 + $0x98] sm:$0xff]
      %v99 = vld [vmem:[#allocation6 + $0xa0] sm:$0xff]
      %v100 = vld [vmem:[#allocation6 + $0xa8] sm:$0xff]
      %v101 = vld [vmem:[#allocation6 + $0xb0] sm:$0xff]
      %v102 = vld [vmem:[#allocation6 + $0xb8] sm:$0xff]
      %v103 = vld [vmem:[#allocation6 + $0xc0] sm:$0xff]
      %v104 = vld [vmem:[#allocation6 + $0xc8] sm:$0xff]
      %v105 = vld [vmem:[#allocation6 + $0xd0] sm:$0xff]
      %v106 = vld [vmem:[#allocation6 + $0xd8] sm:$0xff]
      %v107 = vld [vmem:[#allocation6 + $0xe0] sm:$0xff]
      %v108 = vld [vmem:[#allocation6 + $0xe8] sm:$0xff]
      %v109 = vld [vmem:[#allocation6 + $0xf0] sm:$0xff]
      %v110 = vld [vmem:[#allocation6 + $0xf8] sm:$0xff]
      %v111 = vld [vmem:[#allocation6 + $0x100] sm:$0xff]
      %v112 = vld [vmem:[#allocation6 + $0x108] sm:$0xff]
      %v113 = vld [vmem:[#allocation6 + $0x110] sm:$0xff]
      %v114 = vld [vmem:[#allocation6 + $0x118] sm:$0xff]
      %v115 = vld [vmem:[#allocation6 + $0x120] sm:$0xff]
      %v116 = vld [vmem:[#allocation6 + $0x128] sm:$0xff]
      %v117 = vld [vmem:[#allocation6 + $0x130] sm:$0xff]
      %v118 = vld [vmem:[#allocation6 + $0x138] sm:$0xff]
      %v119 = vld [vmem:[#allocation6 + $0x140] sm:$0xff]
      %v120 = vld [vmem:[#allocation6 + $0x148] sm:$0xff]
      %v121 = vld [vmem:[#allocation6 + $0x150] sm:$0xff]
      %v122 = vld [vmem:[#allocation6 + $0x158] sm:$0xff]
      %v123 = vld [vmem:[#allocation6 + $0x160] sm:$0xff]
      %v124 = vld [vmem:[#allocation6 + $0x168] sm:$0xff]
      %v125 = vld [vmem:[#allocation6 + $0x170] sm:$0xff]
      %v126 = vld [vmem:[#allocation6 + $0x178] sm:$0xff]
      %v127 = vld [vmem:[#allocation6 + $0x180] sm:$0xff]
      %v128 = vld [vmem:[#allocation6 + $0x188] sm:$0xff]
      %v129 = vld [vmem:[#allocation6 + $0x190] sm:$0xff]
      %v130 = vld [vmem:[#allocation6 + $0x198] sm:$0xff]
      %v131 = vld [vmem:[#allocation6 + $0x1a0] sm:$0xff]
      %v132 = vld [vmem:[#allocation6 + $0x1a8] sm:$0xff]
      %v133 = vld [vmem:[#allocation6 + $0x1b0] sm:$0xff]
      %v134 = vld [vmem:[#allocation6 + $0x1b8] sm:$0xff]
      %v135 = vld [vmem:[#allocation6 + $0x1c0] sm:$0xff]
      %v136 = vld [vmem:[#allocation6 + $0x1c8] sm:$0xff]
      %v137 = vld [vmem:[#allocation6 + $0x1d0] sm:$0xff]
      %v138 = vld [vmem:[#allocation6 + $0x1d8] sm:$0xff]
      %v139 = vld [vmem:[#allocation6 + $0x1e0] sm:$0xff]
      %v140 = vld [vmem:[#allocation6 + $0x1e8] sm:$0xff]
      %v141 = vld [vmem:[#allocation6 + $0x1f0] sm:$0xff]
      %v142 = vld [vmem:[#allocation6 + $0x1f8] sm:$0xff]
      %v143 = vld [vmem:[#allocation8] sm:$0xff]
      %v145 = vlaneseq
      %v146 = vshrl.u32 %v145, 7
      %v147 = vsub.s32 0, %v146
      %v148 = vrot.slane %v143, %v147
      %v149 = vlaneseq
      %v150 = vshrl.u32 %v149, 7
      %v151 = vsub.s32 1, %v150
      %v152 = vrot.slane %v143, %v151
      %v153 = vlaneseq
      %v154 = vshrl.u32 %v153, 7
      %v155 = vsub.s32 2, %v154
      %v156 = vrot.slane %v143, %v155
      %v157 = vlaneseq
      %v158 = vshrl.u32 %v157, 7
      %v159 = vsub.s32 3, %v158
      %v160 = vrot.slane %v143, %v159
      %v161 = vlaneseq
      %v162 = vshrl.u32 %v161, 7
      %v163 = vsub.s32 4, %v162
      %v164 = vrot.slane %v143, %v163
      %v165 = vlaneseq
      %v166 = vshrl.u32 %v165, 7
      %v167 = vsub.s32 5, %v166
      %v168 = vrot.slane %v143, %v167
      %v169 = vlaneseq
      %v170 = vshrl.u32 %v169, 7
      %v171 = vsub.s32 6, %v170
      %v172 = vrot.slane %v143, %v171
      %v173 = vlaneseq
      %v174 = vshrl.u32 %v173, 7
      %v175 = vsub.s32 7, %v174
      %v176 = vrot.slane %v143, %v175
      %v249 = vunpack.c.l.b16 %v79
      %v250 = vunpack.c.h.b16 %v79
      %v251 = vunpack.c.l.b16 %v80
      %v252 = vunpack.c.h.b16 %v80
      %v253 = vunpack.c.l.b16 %v81
      %v254 = vunpack.c.h.b16 %v81
      %v255 = vunpack.c.l.b16 %v82
      %v256 = vunpack.c.h.b16 %v82
      %v257 = vunpack.c.l.b16 %v83
      %v258 = vunpack.c.h.b16 %v83
      %v259 = vunpack.c.l.b16 %v84
      %v260 = vunpack.c.h.b16 %v84
      %v261 = vunpack.c.l.b16 %v85
      %v262 = vunpack.c.h.b16 %v85
      %v263 = vunpack.c.l.b16 %v86
      %v264 = vunpack.c.h.b16 %v86
      %v265 = vunpack.c.l.b16 %v87
      %v266 = vunpack.c.h.b16 %v87
      %v267 = vunpack.c.l.b16 %v88
      %v268 = vunpack.c.h.b16 %v88
      %v269 = vunpack.c.l.b16 %v89
      %v270 = vunpack.c.h.b16 %v89
      %v271 = vunpack.c.l.b16 %v90
      %v272 = vunpack.c.h.b16 %v90
      %v273 = vunpack.c.l.b16 %v91
      %v274 = vunpack.c.h.b16 %v91
      %v275 = vunpack.c.l.b16 %v92
      %v276 = vunpack.c.h.b16 %v92
      %v277 = vunpack.c.l.b16 %v93
      %v278 = vunpack.c.h.b16 %v93
      %v279 = vunpack.c.l.b16 %v94
      %v280 = vunpack.c.h.b16 %v94
      %v281 = vunpack.c.l.b16 %v95
      %v282 = vunpack.c.h.b16 %v95
      %v283 = vunpack.c.l.b16 %v96
      %v284 = vunpack.c.h.b16 %v96
      %v285 = vunpack.c.l.b16 %v97
      %v286 = vunpack.c.h.b16 %v97
      %v287 = vunpack.c.l.b16 %v98
      %v288 = vunpack.c.h.b16 %v98
      %v289 = vunpack.c.l.b16 %v99
      %v290 = vunpack.c.h.b16 %v99
      %v291 = vunpack.c.l.b16 %v100
      %v292 = vunpack.c.h.b16 %v100
      %v293 = vunpack.c.l.b16 %v101
      %v294 = vunpack.c.h.b16 %v101
      %v295 = vunpack.c.l.b16 %v102
      %v296 = vunpack.c.h.b16 %v102
      %v297 = vunpack.c.l.b16 %v103
      %v298 = vunpack.c.h.b16 %v103
      %v299 = vunpack.c.l.b16 %v104
      %v300 = vunpack.c.h.b16 %v104
      %v301 = vunpack.c.l.b16 %v105
      %v302 = vunpack.c.h.b16 %v105
      %v303 = vunpack.c.l.b16 %v106
      %v304 = vunpack.c.h.b16 %v106
      %v305 = vunpack.c.l.b16 %v107
      %v306 = vunpack.c.h.b16 %v107
      %v307 = vunpack.c.l.b16 %v108
      %v308 = vunpack.c.h.b16 %v108
      %v309 = vunpack.c.l.b16 %v109
      %v310 = vunpack.c.h.b16 %v109
      %v311 = vunpack.c.l.b16 %v110
      %v312 = vunpack.c.h.b16 %v110
      %v313 = vunpack.c.l.b16 %v111
      %v314 = vunpack.c.h.b16 %v111
      %v315 = vunpack.c.l.b16 %v112
      %v316 = vunpack.c.h.b16 %v112
      %v317 = vunpack.c.l.b16 %v113
      %v318 = vunpack.c.h.b16 %v113
      %v319 = vunpack.c.l.b16 %v114
      %v320 = vunpack.c.h.b16 %v114
      %v321 = vunpack.c.l.b16 %v115
      %v322 = vunpack.c.h.b16 %v115
      %v323 = vunpack.c.l.b16 %v116
      %v324 = vunpack.c.h.b16 %v116
      %v325 = vunpack.c.l.b16 %v117
      %v326 = vunpack.c.h.b16 %v117
      %v327 = vunpack.c.l.b16 %v118
      %v328 = vunpack.c.h.b16 %v118
      %v329 = vunpack.c.l.b16 %v119
      %v330 = vunpack.c.h.b16 %v119
      %v331 = vunpack.c.l.b16 %v120
      %v332 = vunpack.c.h.b16 %v120
      %v333 = vunpack.c.l.b16 %v121
      %v334 = vunpack.c.h.b16 %v121
      %v335 = vunpack.c.l.b16 %v122
      %v336 = vunpack.c.h.b16 %v122
      %v337 = vunpack.c.l.b16 %v123
      %v338 = vunpack.c.h.b16 %v123
      %v339 = vunpack.c.l.b16 %v124
      %v340 = vunpack.c.h.b16 %v124
      %v341 = vunpack.c.l.b16 %v125
      %v342 = vunpack.c.h.b16 %v125
      %v343 = vunpack.c.l.b16 %v126
      %v344 = vunpack.c.h.b16 %v126
      %v345 = vunpack.c.l.b16 %v127
      %v346 = vunpack.c.h.b16 %v127
      %v347 = vunpack.c.l.b16 %v128
      %v348 = vunpack.c.h.b16 %v128
      %v349 = vunpack.c.l.b16 %v129
      %v350 = vunpack.c.h.b16 %v129
      %v351 = vunpack.c.l.b16 %v130
      %v352 = vunpack.c.h.b16 %v130
      %v353 = vunpack.c.l.b16 %v131
      %v354 = vunpack.c.h.b16 %v131
      %v355 = vunpack.c.l.b16 %v132
      %v356 = vunpack.c.h.b16 %v132
      %v357 = vunpack.c.l.b16 %v133
      %v358 = vunpack.c.h.b16 %v133
      %v359 = vunpack.c.l.b16 %v134
      %v360 = vunpack.c.h.b16 %v134
      %v361 = vunpack.c.l.b16 %v135
      %v362 = vunpack.c.h.b16 %v135
      %v363 = vunpack.c.l.b16 %v136
      %v364 = vunpack.c.h.b16 %v136
      %v365 = vunpack.c.l.b16 %v137
      %v366 = vunpack.c.h.b16 %v137
      %v367 = vunpack.c.l.b16 %v138
      %v368 = vunpack.c.h.b16 %v138
      %v369 = vunpack.c.l.b16 %v139
      %v370 = vunpack.c.h.b16 %v139
      %v371 = vunpack.c.l.b16 %v140
      %v372 = vunpack.c.h.b16 %v140
      %v373 = vunpack.c.l.b16 %v141
      %v374 = vunpack.c.h.b16 %v141
      %v375 = vunpack.c.l.b16 %v142
      %v376 = vunpack.c.h.b16 %v142
      %v377 = vpack.c.b16 %v257, %v249
      %v378 = vpack.c.b16 %v258, %v250
      %v379 = vpack.c.b16 %v259, %v251
      %v380 = vpack.c.b16 %v260, %v252
      %v381 = vpack.c.b16 %v261, %v253
      %v382 = vpack.c.b16 %v262, %v254
      %v383 = vpack.c.b16 %v263, %v255
      %v384 = vpack.c.b16 %v264, %v256
      %v385 = vpack.c.b16 %v273, %v265
      %v386 = vpack.c.b16 %v274, %v266
      %v387 = vpack.c.b16 %v275, %v267
      %v388 = vpack.c.b16 %v276, %v268
      %v389 = vpack.c.b16 %v277, %v269
      %v390 = vpack.c.b16 %v278, %v270
      %v391 = vpack.c.b16 %v279, %v271
      %v392 = vpack.c.b16 %v280, %v272
      %v393 = vpack.c.b16 %v289, %v281
      %v394 = vpack.c.b16 %v290, %v282
      %v395 = vpack.c.b16 %v291, %v283
      %v396 = vpack.c.b16 %v292, %v284
      %v397 = vpack.c.b16 %v293, %v285
      %v398 = vpack.c.b16 %v294, %v286
      %v399 = vpack.c.b16 %v295, %v287
      %v400 = vpack.c.b16 %v296, %v288
      %v401 = vpack.c.b16 %v305, %v297
      %v402 = vpack.c.b16 %v306, %v298
      %v403 = vpack.c.b16 %v307, %v299
      %v404 = vpack.c.b16 %v308, %v300
      %v405 = vpack.c.b16 %v309, %v301
      %v406 = vpack.c.b16 %v310, %v302
      %v407 = vpack.c.b16 %v311, %v303
      %v408 = vpack.c.b16 %v312, %v304
      %v409 = vpack.c.b16 %v321, %v313
      %v410 = vpack.c.b16 %v322, %v314
      %v411 = vpack.c.b16 %v323, %v315
      %v412 = vpack.c.b16 %v324, %v316
      %v413 = vpack.c.b16 %v325, %v317
      %v414 = vpack.c.b16 %v326, %v318
      %v415 = vpack.c.b16 %v327, %v319
      %v416 = vpack.c.b16 %v328, %v320
      %v417 = vpack.c.b16 %v337, %v329
      %v418 = vpack.c.b16 %v338, %v330
      %v419 = vpack.c.b16 %v339, %v331
      %v420 = vpack.c.b16 %v340, %v332
      %v421 = vpack.c.b16 %v341, %v333
      %v422 = vpack.c.b16 %v342, %v334
      %v423 = vpack.c.b16 %v343, %v335
      %v424 = vpack.c.b16 %v344, %v336
      %v425 = vpack.c.b16 %v353, %v345
      %v426 = vpack.c.b16 %v354, %v346
      %v427 = vpack.c.b16 %v355, %v347
      %v428 = vpack.c.b16 %v356, %v348
      %v429 = vpack.c.b16 %v357, %v349
      %v430 = vpack.c.b16 %v358, %v350
      %v431 = vpack.c.b16 %v359, %v351
      %v432 = vpack.c.b16 %v360, %v352
      %v433 = vpack.c.b16 %v369, %v361
      %v434 = vpack.c.b16 %v370, %v362
      %v435 = vpack.c.b16 %v371, %v363
      %v436 = vpack.c.b16 %v372, %v364
      %v437 = vpack.c.b16 %v373, %v365
      %v438 = vpack.c.b16 %v374, %v366
      %v439 = vpack.c.b16 %v375, %v367
      %v440 = vpack.c.b16 %v376, %v368
      %505 = vmatprep.subr.bf16.mxu0 %v434
      %506 = vmatpush1.bf16.msra.mxu0 %v433
      %507 = vmatprep.subr.bf16.mxu0 %v426
      %508 = vmatpush1.bf16.msra.mxu0 %v425
      %509 = vmatprep.subr.bf16.mxu0 %v418
      %510 = vmatpush1.bf16.msra.mxu0 %v417
      %511 = vmatprep.subr.bf16.mxu0 %v410
      %512 = vmatpush1.bf16.msra.mxu0 %v409
      %513 = vmatprep.subr.bf16.mxu0 %v402
      %514 = vmatpush1.bf16.msra.mxu0 %v401
      %515 = vmatprep.subr.bf16.mxu0 %v394
      %516 = vmatpush1.bf16.msra.mxu0 %v393
      %517 = vmatprep.subr.bf16.mxu0 %v386
      %518 = vmatpush1.bf16.msra.mxu0 %v385
      %519 = vmatprep.subr.bf16.mxu0 %v378
      %520 = vmatpush1.bf16.msra.mxu0 %v377
      %521 = vmatprep.subr.bf16.mxu0 0
      %522 = vmatpush2.bf16.msra.mxu0 0
      %523 = vmatprep.subr.bf16.mxu0 0
      %524 = vmatpush2.bf16.msra.mxu0 0
      %525 = vmatprep.subr.bf16.mxu0 0
      %526 = vmatpush2.bf16.msra.mxu0 0
      %527 = vmatprep.subr.bf16.mxu0 0
      %528 = vmatpush2.bf16.msra.mxu0 0
      %529 = vmatprep.subr.bf16.mxu0 0
      %530 = vmatpush2.bf16.msra.mxu0 0
      %531 = vmatprep.subr.bf16.mxu0 0
      %532 = vmatpush2.bf16.msra.mxu0 0
      %533 = vmatprep.subr.bf16.mxu0 0
      %534 = vmatpush2.bf16.msra.mxu0 0
      %535 = vmatprep.subr.bf16.mxu0 0
      %536 = vmatpush2.bf16.msra.mxu0 0
      %537 = vmatprep.mubr.bf16.mxu0 0
      %538 = vmatmul.mubr.bf16.gmra.mxu0 %v78
      %v539 = vpop.f32.mrf.mxu0
      %v540 = vadd.f32 %v148, %v539
      %v541 = vpop.f32.mrf.mxu0
      %v542 = vadd.f32 %v152, %v541
      %v543 = vpop.f32.mrf.mxu0
      %v544 = vpop.f32.mrf.mxu0
      %545 = vdwg.mxu0
      %546 = vmatprep.subr.bf16.mxu0 %v436
      %547 = vmatpush1.bf16.msra.mxu0 %v435
      %548 = vmatprep.subr.bf16.mxu0 %v428
      %549 = vmatpush1.bf16.msra.mxu0 %v427
      %550 = vmatprep.subr.bf16.mxu0 %v420
      %551 = vmatpush1.bf16.msra.mxu0 %v419
      %552 = vmatprep.subr.bf16.mxu0 %v412
      %553 = vmatpush1.bf16.msra.mxu0 %v411
      %554 = vmatprep.subr.bf16.mxu0 %v404
      %555 = vmatpush1.bf16.msra.mxu0 %v403
      %556 = vmatprep.subr.bf16.mxu0 %v396
      %557 = vmatpush1.bf16.msra.mxu0 %v395
      %558 = vmatprep.subr.bf16.mxu0 %v388
      %559 = vmatpush1.bf16.msra.mxu0 %v387
      %560 = vmatprep.subr.bf16.mxu0 %v380
      %561 = vmatpush1.bf16.msra.mxu0 %v379
      %562 = vmatprep.subr.bf16.mxu0 0
      %563 = vmatpush2.bf16.msra.mxu0 0
      %564 = vmatprep.subr.bf16.mxu0 0
      %565 = vmatpush2.bf16.msra.mxu0 0
      %566 = vmatprep.subr.bf16.mxu0 0
      %567 = vmatpush2.bf16.msra.mxu0 0
      %568 = vmatprep.subr.bf16.mxu0 0
      %569 = vmatpush2.bf16.msra.mxu0 0
      %570 = vmatprep.subr.bf16.mxu0 0
      %571 = vmatpush2.bf16.msra.mxu0 0
      %572 = vmatprep.subr.bf16.mxu0 0
      %573 = vmatpush2.bf16.msra.mxu0 0
      %574 = vmatprep.subr.bf16.mxu0 0
      %575 = vmatpush2.bf16.msra.mxu0 0
      %576 = vmatprep.subr.bf16.mxu0 0
      %577 = vmatpush2.bf16.msra.mxu0 0
      %578 = vmatprep.mubr.bf16.mxu0 0
      %579 = vmatmul.mubr.bf16.gmra.mxu0 %v78
      %v580 = vpop.f32.mrf.mxu0
      %v581 = vadd.f32 %v156, %v580
      %v582 = vpop.f32.mrf.mxu0
      %v583 = vadd.f32 %v160, %v582
      %v584 = vpop.f32.mrf.mxu0
      %v585 = vpop.f32.mrf.mxu0
      %586 = vdwg.mxu0
      %587 = vmatprep.subr.bf16.mxu0 %v438
      %588 = vmatpush1.bf16.msra.mxu0 %v437
      %589 = vmatprep.subr.bf16.mxu0 %v430
      %590 = vmatpush1.bf16.msra.mxu0 %v429
      %591 = vmatprep.subr.bf16.mxu0 %v422
      %592 = vmatpush1.bf16.msra.mxu0 %v421
      %593 = vmatprep.subr.bf16.mxu0 %v414
      %594 = vmatpush1.bf16.msra.mxu0 %v413
      %595 = vmatprep.subr.bf16.mxu0 %v406
      %596 = vmatpush1.bf16.msra.mxu0 %v405
      %597 = vmatprep.subr.bf16.mxu0 %v398
      %598 = vmatpush1.bf16.msra.mxu0 %v397
      %599 = vmatprep.subr.bf16.mxu0 %v390
      %600 = vmatpush1.bf16.msra.mxu0 %v389
      %601 = vmatprep.subr.bf16.mxu0 %v382
      %602 = vmatpush1.bf16.msra.mxu0 %v381
      %603 = vmatprep.subr.bf16.mxu0 0
      %604 = vmatpush2.bf16.msra.mxu0 0
      %605 = vmatprep.subr.bf16.mxu0 0
      %606 = vmatpush2.bf16.msra.mxu0 0
      %607 = vmatprep.subr.bf16.mxu0 0
      %608 = vmatpush2.bf16.msra.mxu0 0
      %609 = vmatprep.subr.bf16.mxu0 0
      %610 = vmatpush2.bf16.msra.mxu0 0
      %611 = vmatprep.subr.bf16.mxu0 0
      %612 = vmatpush2.bf16.msra.mxu0 0
      %613 = vmatprep.subr.bf16.mxu0 0
      %614 = vmatpush2.bf16.msra.mxu0 0
      %615 = vmatprep.subr.bf16.mxu0 0
      %616 = vmatpush2.bf16.msra.mxu0 0
      %617 = vmatprep.subr.bf16.mxu0 0
      %618 = vmatpush2.bf16.msra.mxu0 0
      %619 = vmatprep.mubr.bf16.mxu0 0
      %620 = vmatmul.mubr.bf16.gmra.mxu0 %v78
      %v621 = vpop.f32.mrf.mxu0
      %v622 = vadd.f32 %v164, %v621
      %v623 = vpop.f32.mrf.mxu0
      %v624 = vadd.f32 %v168, %v623
      %v625 = vpop.f32.mrf.mxu0
      %v626 = vpop.f32.mrf.mxu0
      %627 = vdwg.mxu0
      %628 = vmatprep.subr.bf16.mxu0 %v440
      %629 = vmatpush1.bf16.msra.mxu0 %v439
      %630 = vmatprep.subr.bf16.mxu0 %v432
      %631 = vmatpush1.bf16.msra.mxu0 %v431
      %632 = vmatprep.subr.bf16.mxu0 %v424
      %633 = vmatpush1.bf16.msra.mxu0 %v423
      %634 = vmatprep.subr.bf16.mxu0 %v416
      %635 = vmatpush1.bf16.msra.mxu0 %v415
      %636 = vmatprep.subr.bf16.mxu0 %v408
      %637 = vmatpush1.bf16.msra.mxu0 %v407
      %638 = vmatprep.subr.bf16.mxu0 %v400
      %639 = vmatpush1.bf16.msra.mxu0 %v399
      %640 = vmatprep.subr.bf16.mxu0 %v392
      %641 = vmatpush1.bf16.msra.mxu0 %v391
      %642 = vmatprep.subr.bf16.mxu0 %v384
      %643 = vmatpush1.bf16.msra.mxu0 %v383
      %644 = vmatprep.subr.bf16.mxu0 0
      %645 = vmatpush2.bf16.msra.mxu0 0
      %646 = vmatprep.subr.bf16.mxu0 0
      %647 = vmatpush2.bf16.msra.mxu0 0
      %648 = vmatprep.subr.bf16.mxu0 0
      %649 = vmatpush2.bf16.msra.mxu0 0
      %650 = vmatprep.subr.bf16.mxu0 0
      %651 = vmatpush2.bf16.msra.mxu0 0
      %652 = vmatprep.subr.bf16.mxu0 0
      %653 = vmatpush2.bf16.msra.mxu0 0
      %654 = vmatprep.subr.bf16.mxu0 0
      %655 = vmatpush2.bf16.msra.mxu0 0
      %656 = vmatprep.subr.bf16.mxu0 0
      %657 = vmatpush2.bf16.msra.mxu0 0
      %658 = vmatprep.subr.bf16.mxu0 0
      %659 = vmatpush2.bf16.msra.mxu0 0
      %660 = vmatprep.mubr.bf16.mxu0 0
      %661 = vmatmul.mubr.bf16.gmra.mxu0 %v78
      %v662 = vpop.f32.mrf.mxu0
      %v663 = vadd.f32 %v172, %v662
      %v664 = vpop.f32.mrf.mxu0
      %v665 = vadd.f32 %v176, %v664
      %v666 = vpop.f32.mrf.mxu0
      %v667 = vpop.f32.mrf.mxu0
      %668 = vdwg.mxu0
      %v669 = vtanh.pop %v540
      %v670 = vtanh.pop %v542
      %v671 = vtanh.pop %v581
      %v672 = vtanh.pop %v583
      %v673 = vtanh.pop %v622
      %v674 = vtanh.pop %v624
      %v675 = vtanh.pop %v663
      %v676 = vtanh.pop %v665
      %677 = vst [vmem:[#allocation2] sm:$0xff] %v669
      %678 = vst [vmem:[#allocation2 + $0x8] sm:$0xff] %v670
      %679 = vst [vmem:[#allocation2 + $0x10] sm:$0xff] %v671
      %680 = vst [vmem:[#allocation2 + $0x18] sm:$0xff] %v672
      %681 = vst [vmem:[#allocation2 + $0x20] sm:$0xff] %v673
      %682 = vst [vmem:[#allocation2 + $0x28] sm:$0xff] %v674
      %683 = vst [vmem:[#allocation2 + $0x30] sm:$0xff] %v675
      %684 = vst [vmem:[#allocation2 + $0x38] sm:$0xff] %v676
    $region41: #{tpu_custom_call.1} parent=1 // pred_fallthru
      _
    %v685 = vld [vmem:[#allocation2] sm:$0xff]
    %v686 = vld [vmem:[#allocation2 + $0x8] sm:$0xff]
    %v687 = vld [vmem:[#allocation2 + $0x10] sm:$0xff]
    %v688 = vld [vmem:[#allocation2 + $0x18] sm:$0xff]
    %v689 = vld [vmem:[#allocation2 + $0x20] sm:$0xff]
    %v690 = vld [vmem:[#allocation2 + $0x28] sm:$0xff]
    %v691 = vld [vmem:[#allocation2 + $0x30] sm:$0xff]
    %v692 = vld [vmem:[#allocation2 + $0x38] sm:$0xff]
    %v693 = vpack.c.bf16 %v685, %v685
    %v694 = vpack.c.bf16 %v686, %v686
    %v695 = vpack.c.bf16 %v687, %v687
    %v696 = vpack.c.bf16 %v688, %v688
    %v697 = vpack.c.bf16 %v689, %v689
    %v698 = vpack.c.bf16 %v690, %v690
    %v699 = vpack.c.bf16 %v691, %v691
    %v700 = vpack.c.bf16 %v692, %v692
    %v701 = vld [vmem:[#allocation9] sm:$0xf]
    %v702 = vld [vmem:[#allocation9 + $0x4] sm:$0xf]
    %v703 = vld [vmem:[#allocation9 + $0x8] sm:$0xf]
    %v704 = vld [vmem:[#allocation9 + $0xc] sm:$0xf]
    %v705 = vld [vmem:[#allocation9 + $0x10] sm:$0xf]
    %v706 = vld [vmem:[#allocation9 + $0x14] sm:$0xf]
    %v707 = vld [vmem:[#allocation9 + $0x18] sm:$0xf]
    %v708 = vld [vmem:[#allocation9 + $0x1c] sm:$0xf]
    %v709 = vld [vmem:[#allocation9 + $0x20] sm:$0xf]
    %v710 = vld [vmem:[#allocation9 + $0x24] sm:$0xf]
    %v711 = vld [vmem:[#allocation9 + $0x28] sm:$0xf]
    %v712 = vld [vmem:[#allocation9 + $0x2c] sm:$0xf]
    %v713 = vld [vmem:[#allocation9 + $0x30] sm:$0xf]
    %v714 = vld [vmem:[#allocation9 + $0x34] sm:$0xf]
    %v715 = vld [vmem:[#allocation9 + $0x38] sm:$0xf]
    %v716 = vld [vmem:[#allocation9 + $0x3c] sm:$0xf]
    %v717 = vld [vmem:[#allocation9 + $0x40] sm:$0xf]
    %v718 = vld [vmem:[#allocation9 + $0x44] sm:$0xf]
    %v719 = vld [vmem:[#allocation9 + $0x48] sm:$0xf]
    %v720 = vld [vmem:[#allocation9 + $0x4c] sm:$0xf]
    %v721 = vld [vmem:[#allocation9 + $0x50] sm:$0xf]
    %v722 = vld [vmem:[#allocation9 + $0x54] sm:$0xf]
    %v723 = vld [vmem:[#allocation9 + $0x58] sm:$0xf]
    %v724 = vld [vmem:[#allocation9 + $0x5c] sm:$0xf]
    %v725 = vld [vmem:[#allocation9 + $0x60] sm:$0xf]
    %v726 = vld [vmem:[#allocation9 + $0x64] sm:$0xf]
    %v727 = vld [vmem:[#allocation9 + $0x68] sm:$0xf]
    %v728 = vld [vmem:[#allocation9 + $0x6c] sm:$0xf]
    %v729 = vld [vmem:[#allocation9 + $0x70] sm:$0xf]
    %v730 = vld [vmem:[#allocation9 + $0x74] sm:$0xf]
    %v731 = vld [vmem:[#allocation9 + $0x78] sm:$0xf]
    %v732 = vld [vmem:[#allocation9 + $0x7c] sm:$0xf]
    %v733 = vld [vmem:[#allocation9 + $0x80] sm:$0xf]
    %v734 = vld [vmem:[#allocation9 + $0x84] sm:$0xf]
    %v735 = vld [vmem:[#allocation9 + $0x88] sm:$0xf]
    %v736 = vld [vmem:[#allocation9 + $0x8c] sm:$0xf]
    %v737 = vld [vmem:[#allocation9 + $0x90] sm:$0xf]
    %v738 = vld [vmem:[#allocation9 + $0x94] sm:$0xf]
    %v739 = vld [vmem:[#allocation9 + $0x98] sm:$0xf]
    %v740 = vld [vmem:[#allocation9 + $0x9c] sm:$0xf]
    %v741 = vld [vmem:[#allocation9 + $0xa0] sm:$0xf]
    %v742 = vld [vmem:[#allocation9 + $0xa4] sm:$0xf]
    %v743 = vld [vmem:[#allocation9 + $0xa8] sm:$0xf]
    %v744 = vld [vmem:[#allocation9 + $0xac] sm:$0xf]
    %v745 = vld [vmem:[#allocation9 + $0xb0] sm:$0xf]
    %v746 = vld [vmem:[#allocation9 + $0xb4] sm:$0xf]
    %v747 = vld [vmem:[#allocation9 + $0xb8] sm:$0xf]
    %v748 = vld [vmem:[#allocation9 + $0xbc] sm:$0xf]
    %v749 = vld [vmem:[#allocation9 + $0xc0] sm:$0xf]
    %v750 = vld [vmem:[#allocation9 + $0xc4] sm:$0xf]
    %v751 = vld [vmem:[#allocation9 + $0xc8] sm:$0xf]
    %v752 = vld [vmem:[#allocation9 + $0xcc] sm:$0xf]
    %v753 = vld [vmem:[#allocation9 + $0xd0] sm:$0xf]
    %v754 = vld [vmem:[#allocation9 + $0xd4] sm:$0xf]
    %v755 = vld [vmem:[#allocation9 + $0xd8] sm:$0xf]
    %v756 = vld [vmem:[#allocation9 + $0xdc] sm:$0xf]
    %v757 = vld [vmem:[#allocation9 + $0xe0] sm:$0xf]
    %v758 = vld [vmem:[#allocation9 + $0xe4] sm:$0xf]
    %v759 = vld [vmem:[#allocation9 + $0xe8] sm:$0xf]
    %v760 = vld [vmem:[#allocation9 + $0xec] sm:$0xf]
    %v761 = vld [vmem:[#allocation9 + $0xf0] sm:$0xf]
    %v762 = vld [vmem:[#allocation9 + $0xf4] sm:$0xf]
    %v763 = vld [vmem:[#allocation9 + $0xf8] sm:$0xf]
    %v764 = vld [vmem:[#allocation9 + $0xfc] sm:$0xf]
    %v765 = vld [vmem:[#allocation9 + $0x100] sm:$0xf]
    %v766 = vld [vmem:[#allocation9 + $0x104] sm:$0xf]
    %v767 = vld [vmem:[#allocation9 + $0x108] sm:$0xf]
    %v768 = vld [vmem:[#allocation9 + $0x10c] sm:$0xf]
    %v769 = vld [vmem:[#allocation9 + $0x110] sm:$0xf]
    %v770 = vld [vmem:[#allocation9 + $0x114] sm:$0xf]
    %v771 = vld [vmem:[#allocation9 + $0x118] sm:$0xf]
    %v772 = vld [vmem:[#allocation9 + $0x11c] sm:$0xf]
    %v773 = vld [vmem:[#allocation9 + $0x120] sm:$0xf]
    %v774 = vld [vmem:[#allocation9 + $0x124] sm:$0xf]
    %v775 = vld [vmem:[#allocation9 + $0x128] sm:$0xf]
    %v776 = vld [vmem:[#allocation9 + $0x12c] sm:$0xf]
    %v777 = vld [vmem:[#allocation9 + $0x130] sm:$0xf]
    %v778 = vld [vmem:[#allocation9 + $0x134] sm:$0xf]
    %v779 = vld [vmem:[#allocation9 + $0x138] sm:$0xf]
    %v780 = vld [vmem:[#allocation9 + $0x13c] sm:$0xf]
    %v781 = vld [vmem:[#allocation9 + $0x140] sm:$0xf]
    %v782 = vld [vmem:[#allocation9 + $0x144] sm:$0xf]
    %v783 = vld [vmem:[#allocation9 + $0x148] sm:$0xf]
    %v784 = vld [vmem:[#allocation9 + $0x14c] sm:$0xf]
    %v785 = vld [vmem:[#allocation9 + $0x150] sm:$0xf]
    %v786 = vld [vmem:[#allocation9 + $0x154] sm:$0xf]
    %v787 = vld [vmem:[#allocation9 + $0x158] sm:$0xf]
    %v788 = vld [vmem:[#allocation9 + $0x15c] sm:$0xf]
    %v789 = vld [vmem:[#allocation9 + $0x160] sm:$0xf]
    %v790 = vld [vmem:[#allocation9 + $0x164] sm:$0xf]
    %v791 = vld [vmem:[#allocation9 + $0x168] sm:$0xf]
    %v792 = vld [vmem:[#allocation9 + $0x16c] sm:$0xf]
    %v793 = vld [vmem:[#allocation9 + $0x170] sm:$0xf]
    %v794 = vld [vmem:[#allocation9 + $0x174] sm:$0xf]
    %v795 = vld [vmem:[#allocation9 + $0x178] sm:$0xf]
    %v796 = vld [vmem:[#allocation9 + $0x17c] sm:$0xf]
    %v797 = vld [vmem:[#allocation9 + $0x180] sm:$0xf]
    %v798 = vld [vmem:[#allocation9 + $0x184] sm:$0xf]
    %v799 = vld [vmem:[#allocation9 + $0x188] sm:$0xf]
    %v800 = vld [vmem:[#allocation9 + $0x18c] sm:$0xf]
    %v801 = vld [vmem:[#allocation9 + $0x190] sm:$0xf]
    %v802 = vld [vmem:[#allocation9 + $0x194] sm:$0xf]
    %v803 = vld [vmem:[#allocation9 + $0x198] sm:$0xf]
    %v804 = vld [vmem:[#allocation9 + $0x19c] sm:$0xf]
    %v805 = vld [vmem:[#allocation9 + $0x1a0] sm:$0xf]
    %v806 = vld [vmem:[#allocation9 + $0x1a4] sm:$0xf]
    %v807 = vld [vmem:[#allocation9 + $0x1a8] sm:$0xf]
    %v808 = vld [vmem:[#allocation9 + $0x1ac] sm:$0xf]
    %v809 = vld [vmem:[#allocation9 + $0x1b0] sm:$0xf]
    %v810 = vld [vmem:[#allocation9 + $0x1b4] sm:$0xf]
    %v811 = vld [vmem:[#allocation9 + $0x1b8] sm:$0xf]
    %v812 = vld [vmem:[#allocation9 + $0x1bc] sm:$0xf]
    %v813 = vld [vmem:[#allocation9 + $0x1c0] sm:$0xf]
    %v814 = vld [vmem:[#allocation9 + $0x1c4] sm:$0xf]
    %v815 = vld [vmem:[#allocation9 + $0x1c8] sm:$0xf]
    %v816 = vld [vmem:[#allocation9 + $0x1cc] sm:$0xf]
    %v817 = vld [vmem:[#allocation9 + $0x1d0] sm:$0xf]
    %v818 = vld [vmem:[#allocation9 + $0x1d4] sm:$0xf]
    %v819 = vld [vmem:[#allocation9 + $0x1d8] sm:$0xf]
    %v820 = vld [vmem:[#allocation9 + $0x1dc] sm:$0xf]
    %v821 = vld [vmem:[#allocation9 + $0x1e0] sm:$0xf]
    %v822 = vld [vmem:[#allocation9 + $0x1e4] sm:$0xf]
    %v823 = vld [vmem:[#allocation9 + $0x1e8] sm:$0xf]
    %v824 = vld [vmem:[#allocation9 + $0x1ec] sm:$0xf]
    %v825 = vld [vmem:[#allocation9 + $0x1f0] sm:$0xf]
    %v826 = vld [vmem:[#allocation9 + $0x1f4] sm:$0xf]
    %v827 = vld [vmem:[#allocation9 + $0x1f8] sm:$0xf]
    %v828 = vld [vmem:[#allocation9 + $0x1fc] sm:$0xf]
    %v829 = vld [vmem:[%s4] sm:$0x1]
    %v831 = vlaneseq
    %v832 = vshrl.u32 %v831, 7
    %v833 = vsub.s32 0, %v832
    %v834 = vrot.slane %v829, %v833
    %v964 = vunpack.c.l.b16 %v701
    %v965 = vunpack.c.l.b16 %v702
    %v966 = vunpack.c.l.b16 %v703
    %v967 = vunpack.c.l.b16 %v704
    %v968 = vunpack.c.l.b16 %v705
    %v969 = vunpack.c.l.b16 %v706
    %v970 = vunpack.c.l.b16 %v707
    %v971 = vunpack.c.l.b16 %v708
    %v972 = vunpack.c.l.b16 %v709
    %v973 = vunpack.c.l.b16 %v710
    %v974 = vunpack.c.l.b16 %v711
    %v975 = vunpack.c.l.b16 %v712
    %v976 = vunpack.c.l.b16 %v713
    %v977 = vunpack.c.l.b16 %v714
    %v978 = vunpack.c.l.b16 %v715
    %v979 = vunpack.c.l.b16 %v716
    %v980 = vunpack.c.l.b16 %v717
    %v981 = vunpack.c.l.b16 %v718
    %v982 = vunpack.c.l.b16 %v719
    %v983 = vunpack.c.l.b16 %v720
    %v984 = vunpack.c.l.b16 %v721
    %v985 = vunpack.c.l.b16 %v722
    %v986 = vunpack.c.l.b16 %v723
    %v987 = vunpack.c.l.b16 %v724
    %v988 = vunpack.c.l.b16 %v725
    %v989 = vunpack.c.l.b16 %v726
    %v990 = vunpack.c.l.b16 %v727
    %v991 = vunpack.c.l.b16 %v728
    %v992 = vunpack.c.l.b16 %v729
    %v993 = vunpack.c.l.b16 %v730
    %v994 = vunpack.c.l.b16 %v731
    %v995 = vunpack.c.l.b16 %v732
    %v996 = vunpack.c.l.b16 %v733
    %v997 = vunpack.c.l.b16 %v734
    %v998 = vunpack.c.l.b16 %v735
    %v999 = vunpack.c.l.b16 %v736
    %v1000 = vunpack.c.l.b16 %v737
    %v1001 = vunpack.c.l.b16 %v738
    %v1002 = vunpack.c.l.b16 %v739
    %v1003 = vunpack.c.l.b16 %v740
    %v1004 = vunpack.c.l.b16 %v741
    %v1005 = vunpack.c.l.b16 %v742
    %v1006 = vunpack.c.l.b16 %v743
    %v1007 = vunpack.c.l.b16 %v744
    %v1008 = vunpack.c.l.b16 %v745
    %v1009 = vunpack.c.l.b16 %v746
    %v1010 = vunpack.c.l.b16 %v747
    %v1011 = vunpack.c.l.b16 %v748
    %v1012 = vunpack.c.l.b16 %v749
    %v1013 = vunpack.c.l.b16 %v750
    %v1014 = vunpack.c.l.b16 %v751
    %v1015 = vunpack.c.l.b16 %v752
    %v1016 = vunpack.c.l.b16 %v753
    %v1017 = vunpack.c.l.b16 %v754
    %v1018 = vunpack.c.l.b16 %v755
    %v1019 = vunpack.c.l.b16 %v756
    %v1020 = vunpack.c.l.b16 %v757
    %v1021 = vunpack.c.l.b16 %v758
    %v1022 = vunpack.c.l.b16 %v759
    %v1023 = vunpack.c.l.b16 %v760
    %v1024 = vunpack.c.l.b16 %v761
    %v1025 = vunpack.c.l.b16 %v762
    %v1026 = vunpack.c.l.b16 %v763
    %v1027 = vunpack.c.l.b16 %v764
    %v1028 = vunpack.c.l.b16 %v765
    %v1029 = vunpack.c.l.b16 %v766
    %v1030 = vunpack.c.l.b16 %v767
    %v1031 = vunpack.c.l.b16 %v768
    %v1032 = vunpack.c.l.b16 %v769
    %v1033 = vunpack.c.l.b16 %v770
    %v1034 = vunpack.c.l.b16 %v771
    %v1035 = vunpack.c.l.b16 %v772
    %v1036 = vunpack.c.l.b16 %v773
    %v1037 = vunpack.c.l.b16 %v774
    %v1038 = vunpack.c.l.b16 %v775
    %v1039 = vunpack.c.l.b16 %v776
    %v1040 = vunpack.c.l.b16 %v777
    %v1041 = vunpack.c.l.b16 %v778
    %v1042 = vunpack.c.l.b16 %v779
    %v1043 = vunpack.c.l.b16 %v780
    %v1044 = vunpack.c.l.b16 %v781
    %v1045 = vunpack.c.l.b16 %v782
    %v1046 = vunpack.c.l.b16 %v783
    %v1047 = vunpack.c.l.b16 %v784
    %v1048 = vunpack.c.l.b16 %v785
    %v1049 = vunpack.c.l.b16 %v786
    %v1050 = vunpack.c.l.b16 %v787
    %v1051 = vunpack.c.l.b16 %v788
    %v1052 = vunpack.c.l.b16 %v789
    %v1053 = vunpack.c.l.b16 %v790
    %v1054 = vunpack.c.l.b16 %v791
    %v1055 = vunpack.c.l.b16 %v792
    %v1056 = vunpack.c.l.b16 %v793
    %v1057 = vunpack.c.l.b16 %v794
    %v1058 = vunpack.c.l.b16 %v795
    %v1059 = vunpack.c.l.b16 %v796
    %v1060 = vunpack.c.l.b16 %v797
    %v1061 = vunpack.c.l.b16 %v798
    %v1062 = vunpack.c.l.b16 %v799
    %v1063 = vunpack.c.l.b16 %v800
    %v1064 = vunpack.c.l.b16 %v801
    %v1065 = vunpack.c.l.b16 %v802
    %v1066 = vunpack.c.l.b16 %v803
    %v1067 = vunpack.c.l.b16 %v804
    %v1068 = vunpack.c.l.b16 %v805
    %v1069 = vunpack.c.l.b16 %v806
    %v1070 = vunpack.c.l.b16 %v807
    %v1071 = vunpack.c.l.b16 %v808
    %v1072 = vunpack.c.l.b16 %v809
    %v1073 = vunpack.c.l.b16 %v810
    %v1074 = vunpack.c.l.b16 %v811
    %v1075 = vunpack.c.l.b16 %v812
    %v1076 = vunpack.c.l.b16 %v813
    %v1077 = vunpack.c.l.b16 %v814
    %v1078 = vunpack.c.l.b16 %v815
    %v1079 = vunpack.c.l.b16 %v816
    %v1080 = vunpack.c.l.b16 %v817
    %v1081 = vunpack.c.l.b16 %v818
    %v1082 = vunpack.c.l.b16 %v819
    %v1083 = vunpack.c.l.b16 %v820
    %v1084 = vunpack.c.l.b16 %v821
    %v1085 = vunpack.c.l.b16 %v822
    %v1086 = vunpack.c.l.b16 %v823
    %v1087 = vunpack.c.l.b16 %v824
    %v1088 = vunpack.c.l.b16 %v825
    %v1089 = vunpack.c.l.b16 %v826
    %v1090 = vunpack.c.l.b16 %v827
    %v1091 = vunpack.c.l.b16 %v828
    %v1092 = vpack.c.b16 %v965, %v964
    %v1093 = vpack.c.b16 %v967, %v966
    %v1094 = vpack.c.b16 %v969, %v968
    %v1095 = vpack.c.b16 %v971, %v970
    %v1096 = vpack.c.b16 %v973, %v972
    %v1097 = vpack.c.b16 %v975, %v974
    %v1098 = vpack.c.b16 %v977, %v976
    %v1099 = vpack.c.b16 %v979, %v978
    %v1100 = vpack.c.b16 %v981, %v980
    %v1101 = vpack.c.b16 %v983, %v982
    %v1102 = vpack.c.b16 %v985, %v984
    %v1103 = vpack.c.b16 %v987, %v986
    %v1104 = vpack.c.b16 %v989, %v988
    %v1105 = vpack.c.b16 %v991, %v990
    %v1106 = vpack.c.b16 %v993, %v992
    %v1107 = vpack.c.b16 %v995, %v994
    %v1108 = vpack.c.b16 %v997, %v996
    %v1109 = vpack.c.b16 %v999, %v998
    %v1110 = vpack.c.b16 %v1001, %v1000
    %v1111 = vpack.c.b16 %v1003, %v1002
    %v1112 = vpack.c.b16 %v1005, %v1004
    %v1113 = vpack.c.b16 %v1007, %v1006
    %v1114 = vpack.c.b16 %v1009, %v1008
    %v1115 = vpack.c.b16 %v1011, %v1010
    %v1116 = vpack.c.b16 %v1013, %v1012
    %v1117 = vpack.c.b16 %v1015, %v1014
    %v1118 = vpack.c.b16 %v1017, %v1016
    %v1119 = vpack.c.b16 %v1019, %v1018
    %v1120 = vpack.c.b16 %v1021, %v1020
    %v1121 = vpack.c.b16 %v1023, %v1022
    %v1122 = vpack.c.b16 %v1025, %v1024
    %v1123 = vpack.c.b16 %v1027, %v1026
    %v1124 = vpack.c.b16 %v1029, %v1028
    %v1125 = vpack.c.b16 %v1031, %v1030
    %v1126 = vpack.c.b16 %v1033, %v1032
    %v1127 = vpack.c.b16 %v1035, %v1034
    %v1128 = vpack.c.b16 %v1037, %v1036
    %v1129 = vpack.c.b16 %v1039, %v1038
    %v1130 = vpack.c.b16 %v1041, %v1040
    %v1131 = vpack.c.b16 %v1043, %v1042
    %v1132 = vpack.c.b16 %v1045, %v1044
    %v1133 = vpack.c.b16 %v1047, %v1046
    %v1134 = vpack.c.b16 %v1049, %v1048
    %v1135 = vpack.c.b16 %v1051, %v1050
    %v1136 = vpack.c.b16 %v1053, %v1052
    %v1137 = vpack.c.b16 %v1055, %v1054
    %v1138 = vpack.c.b16 %v1057, %v1056
    %v1139 = vpack.c.b16 %v1059, %v1058
    %v1140 = vpack.c.b16 %v1061, %v1060
    %v1141 = vpack.c.b16 %v1063, %v1062
    %v1142 = vpack.c.b16 %v1065, %v1064
    %v1143 = vpack.c.b16 %v1067, %v1066
    %v1144 = vpack.c.b16 %v1069, %v1068
    %v1145 = vpack.c.b16 %v1071, %v1070
    %v1146 = vpack.c.b16 %v1073, %v1072
    %v1147 = vpack.c.b16 %v1075, %v1074
    %v1148 = vpack.c.b16 %v1077, %v1076
    %v1149 = vpack.c.b16 %v1079, %v1078
    %v1150 = vpack.c.b16 %v1081, %v1080
    %v1151 = vpack.c.b16 %v1083, %v1082
    %v1152 = vpack.c.b16 %v1085, %v1084
    %v1153 = vpack.c.b16 %v1087, %v1086
    %v1154 = vpack.c.b16 %v1089, %v1088
    %v1155 = vpack.c.b16 %v1091, %v1090
    %1220 = vmatprep.subr.bf16.mxu0 0
    %1221 = vmatpush1.bf16.msra.mxu0 %v1099
    %1222 = vmatprep.subr.bf16.mxu0 0
    %1223 = vmatpush1.bf16.msra.mxu0 %v1098
    %1224 = vmatprep.subr.bf16.mxu0 0
    %1225 = vmatpush1.bf16.msra.mxu0 %v1097
    %1226 = vmatprep.subr.bf16.mxu0 0
    %1227 = vmatpush1.bf16.msra.mxu0 %v1096
    %1228 = vmatprep.subr.bf16.mxu0 0
    %1229 = vmatpush1.bf16.msra.mxu0 %v1095
    %1230 = vmatprep.subr.bf16.mxu0 0
    %1231 = vmatpush1.bf16.msra.mxu0 %v1094
    %1232 = vmatprep.subr.bf16.mxu0 0
    %1233 = vmatpush1.bf16.msra.mxu0 %v1093
    %1234 = vmatprep.subr.bf16.mxu0 0
    %1235 = vmatpush1.bf16.msra.mxu0 %v1092
    %1236 = vmatprep.subr.bf16.mxu0 0
    %1237 = vmatpush2.bf16.msra.mxu0 %v1107
    %1238 = vmatprep.subr.bf16.mxu0 0
    %1239 = vmatpush2.bf16.msra.mxu0 %v1106
    %1240 = vmatprep.subr.bf16.mxu0 0
    %1241 = vmatpush2.bf16.msra.mxu0 %v1105
    %1242 = vmatprep.subr.bf16.mxu0 0
    %1243 = vmatpush2.bf16.msra.mxu0 %v1104
    %1244 = vmatprep.subr.bf16.mxu0 0
    %1245 = vmatpush2.bf16.msra.mxu0 %v1103
    %1246 = vmatprep.subr.bf16.mxu0 0
    %1247 = vmatpush2.bf16.msra.mxu0 %v1102
    %1248 = vmatprep.subr.bf16.mxu0 0
    %1249 = vmatpush2.bf16.msra.mxu0 %v1101
    %1250 = vmatprep.subr.bf16.mxu0 0
    %1251 = vmatpush2.bf16.msra.mxu0 %v1100
    %1252 = vmatprep.mubr.bf16.mxu0 %v694
    %1253 = vmatmul.mubr.bf16.gmra.mxu0 %v693
    %v1254 = vpop.f32.mrf.mxu0
    %v1255 = vadd.f32 %v834, %v1254
    %v1256 = vpop.f32.mrf.mxu0
    %v1257 = vpop.f32.mrf.mxu0
    %v1258 = vpop.f32.mrf.mxu0
    %1259 = vdwg.mxu0
    %1260 = vmatprep.subr.bf16.mxu0 0
    %1261 = vmatpush1.bf16.msra.mxu0 %v1115
    %1262 = vmatprep.subr.bf16.mxu0 0
    %1263 = vmatpush1.bf16.msra.mxu0 %v1114
    %1264 = vmatprep.subr.bf16.mxu0 0
    %1265 = vmatpush1.bf16.msra.mxu0 %v1113
    %1266 = vmatprep.subr.bf16.mxu0 0
    %1267 = vmatpush1.bf16.msra.mxu0 %v1112
    %1268 = vmatprep.subr.bf16.mxu0 0
    %1269 = vmatpush1.bf16.msra.mxu0 %v1111
    %1270 = vmatprep.subr.bf16.mxu0 0
    %1271 = vmatpush1.bf16.msra.mxu0 %v1110
    %1272 = vmatprep.subr.bf16.mxu0 0
    %1273 = vmatpush1.bf16.msra.mxu0 %v1109
    %1274 = vmatprep.subr.bf16.mxu0 0
    %1275 = vmatpush1.bf16.msra.mxu0 %v1108
    %1276 = vmatprep.subr.bf16.mxu0 0
    %1277 = vmatpush2.bf16.msra.mxu0 %v1123
    %1278 = vmatprep.subr.bf16.mxu0 0
    %1279 = vmatpush2.bf16.msra.mxu0 %v1122
    %1280 = vmatprep.subr.bf16.mxu0 0
    %1281 = vmatpush2.bf16.msra.mxu0 %v1121
    %1282 = vmatprep.subr.bf16.mxu0 0
    %1283 = vmatpush2.bf16.msra.mxu0 %v1120
    %1284 = vmatprep.subr.bf16.mxu0 0
    %1285 = vmatpush2.bf16.msra.mxu0 %v1119
    %1286 = vmatprep.subr.bf16.mxu0 0
    %1287 = vmatpush2.bf16.msra.mxu0 %v1118
    %1288 = vmatprep.subr.bf16.mxu0 0
    %1289 = vmatpush2.bf16.msra.mxu0 %v1117
    %1290 = vmatprep.subr.bf16.mxu0 0
    %1291 = vmatpush2.bf16.msra.mxu0 %v1116
    %1292 = vmatprep.mubr.bf16.mxu0 %v696
    %1293 = vmatmul.mubr.bf16.gmra.mxu0 %v695
    %v1294 = vpop.f32.mrf.mxu0
    %v1295 = vadd.f32 %v1255, %v1294
    %v1296 = vpop.f32.mrf.mxu0
    %v1297 = vpop.f32.mrf.mxu0
    %v1298 = vpop.f32.mrf.mxu0
    %1299 = vdwg.mxu0
    %1300 = vmatprep.subr.bf16.mxu0 0
    %1301 = vmatpush1.bf16.msra.mxu0 %v1131
    %1302 = vmatprep.subr.bf16.mxu0 0
    %1303 = vmatpush1.bf16.msra.mxu0 %v1130
    %1304 = vmatprep.subr.bf16.mxu0 0
    %1305 = vmatpush1.bf16.msra.mxu0 %v1129
    %1306 = vmatprep.subr.bf16.mxu0 0
    %1307 = vmatpush1.bf16.msra.mxu0 %v1128
    %1308 = vmatprep.subr.bf16.mxu0 0
    %1309 = vmatpush1.bf16.msra.mxu0 %v1127
    %1310 = vmatprep.subr.bf16.mxu0 0
    %1311 = vmatpush1.bf16.msra.mxu0 %v1126
    %1312 = vmatprep.subr.bf16.mxu0 0
    %1313 = vmatpush1.bf16.msra.mxu0 %v1125
    %1314 = vmatprep.subr.bf16.mxu0 0
    %1315 = vmatpush1.bf16.msra.mxu0 %v1124
    %1316 = vmatprep.subr.bf16.mxu0 0
    %1317 = vmatpush2.bf16.msra.mxu0 %v1139
    %1318 = vmatprep.subr.bf16.mxu0 0
    %1319 = vmatpush2.bf16.msra.mxu0 %v1138
    %1320 = vmatprep.subr.bf16.mxu0 0
    %1321 = vmatpush2.bf16.msra.mxu0 %v1137
    %1322 = vmatprep.subr.bf16.mxu0 0
    %1323 = vmatpush2.bf16.msra.mxu0 %v1136
    %1324 = vmatprep.subr.bf16.mxu0 0
    %1325 = vmatpush2.bf16.msra.mxu0 %v1135
    %1326 = vmatprep.subr.bf16.mxu0 0
    %1327 = vmatpush2.bf16.msra.mxu0 %v1134
    %1328 = vmatprep.subr.bf16.mxu0 0
    %1329 = vmatpush2.bf16.msra.mxu0 %v1133
    %1330 = vmatprep.subr.bf16.mxu0 0
    %1331 = vmatpush2.bf16.msra.mxu0 %v1132
    %1332 = vmatprep.mubr.bf16.mxu0 %v698
    %1333 = vmatmul.mubr.bf16.gmra.mxu0 %v697
    %v1334 = vpop.f32.mrf.mxu0
    %v1335 = vadd.f32 %v1295, %v1334
    %v1336 = vpop.f32.mrf.mxu0
    %v1337 = vpop.f32.mrf.mxu0
    %v1338 = vpop.f32.mrf.mxu0
    %1339 = vdwg.mxu0
    %1340 = vmatprep.subr.bf16.mxu0 0
    %1341 = vmatpush1.bf16.msra.mxu0 %v1147
    %1342 = vmatprep.subr.bf16.mxu0 0
    %1343 = vmatpush1.bf16.msra.mxu0 %v1146
    %1344 = vmatprep.subr.bf16.mxu0 0
    %1345 = vmatpush1.bf16.msra.mxu0 %v1145
    %1346 = vmatprep.subr.bf16.mxu0 0
    %1347 = vmatpush1.bf16.msra.mxu0 %v1144
    %1348 = vmatprep.subr.bf16.mxu0 0
    %1349 = vmatpush1.bf16.msra.mxu0 %v1143
    %1350 = vmatprep.subr.bf16.mxu0 0
    %1351 = vmatpush1.bf16.msra.mxu0 %v1142
    %1352 = vmatprep.subr.bf16.mxu0 0
    %1353 = vmatpush1.bf16.msra.mxu0 %v1141
    %1354 = vmatprep.subr.bf16.mxu0 0
    %1355 = vmatpush1.bf16.msra.mxu0 %v1140
    %1356 = vmatprep.subr.bf16.mxu0 0
    %1357 = vmatpush2.bf16.msra.mxu0 %v1155
    %1358 = vmatprep.subr.bf16.mxu0 0
    %1359 = vmatpush2.bf16.msra.mxu0 %v1154
    %1360 = vmatprep.subr.bf16.mxu0 0
    %1361 = vmatpush2.bf16.msra.mxu0 %v1153
    %1362 = vmatprep.subr.bf16.mxu0 0
    %1363 = vmatpush2.bf16.msra.mxu0 %v1152
    %1364 = vmatprep.subr.bf16.mxu0 0
    %1365 = vmatpush2.bf16.msra.mxu0 %v1151
    %1366 = vmatprep.subr.bf16.mxu0 0
    %1367 = vmatpush2.bf16.msra.mxu0 %v1150
    %1368 = vmatprep.subr.bf16.mxu0 0
    %1369 = vmatpush2.bf16.msra.mxu0 %v1149
    %1370 = vmatprep.subr.bf16.mxu0 0
    %1371 = vmatpush2.bf16.msra.mxu0 %v1148
    %1372 = vmatprep.mubr.bf16.mxu0 %v700
    %1373 = vmatmul.mubr.bf16.gmra.mxu0 %v699
    %v1374 = vpop.f32.mrf.mxu0
    %v1375 = vadd.f32 %v1335, %v1374
    %v1376 = vpop.f32.mrf.mxu0
    %v1377 = vpop.f32.mrf.mxu0
    %v1378 = vpop.f32.mrf.mxu0
    %1379 = vdwg.mxu0
    %v1380 = vxor.u32 %v1375, 2147483648
    %v1381 = vmul.f32 %v1380, 1.442695
    %v1382 = vpow.pop %v1381
    %v1383 = vadd.f32 %v1382, 1.0
    %v1384 = vrcp.pop %v1383
    %v1385 = vmul.f32 1.0, %v1384
    %1386 = vst [vmem:[#allocation11] sm:$0xff] %v1385
    // Predicated region
    $region42: #{tpu_custom_call.1} parent=1 // pred_check
      _
    $region43: #{tpu_custom_call.1} parent=1 // pred_check_branch
      %1388 = sbr.rel (0) target = $region45
    $region44: #{tpu_custom_call.1} parent=1 // pred_region
      %s1390 = ssub.s32 128, 128
      %1391 = vsyncadd [#allocation5], %s1390
      %s1393 = sshll.u32 [#allocation11], 4
      %s1394 = int_to_ptr.vmem [resolvable:$true] %s1393
      %1396 = dma.vmem_to_hbm [thread:$0]  %s1394, 128, %s5, [#allocation5]
    $region45: #{tpu_custom_call.1} parent=1 // pred_fallthru
      _
    // Predicated region
    $region46: #{tpu_custom_call.1} parent=1 // pred_check
      _
    $region47: #{tpu_custom_call.1} parent=1 // pred_check_branch
      %1398 = sbr.rel (0) target = $region49
    $region48: #{tpu_custom_call.1} parent=1 // pred_region
      %1399 = dma.done [#allocation5], 128
    $region49: #{tpu_custom_call.1} parent=1 // pred_fallthru
      _
    %1400 = vsyncpa [#allocation4], 1
    %1401 = vsyncpa [#allocation7], 1
    %1402 = vsyncpa [#allocation10], 1
    %1403 = vsyncpa [#allocation5], 1

</llo_original>
